<compile_context>
chip_gen: v6e
topology: v6e:2x2x1
jax: 0.10.0
libtpu: 0.0.40
codegen_flags: <defaults>
</compile_context>

<pallas_src>
import functools

import jax
import jax.numpy as jnp
from jax.experimental import pallas as pl
from jax.experimental.pallas import tpu as pltpu

_FP = 128  # lane-dense padded feature width


# ----------------------------- Pallas kernel --------------------------------

def _jknet_kernel(adj_ref, h0_ref, w_ref, b_ref, wf_ref, bf_ref,
                  out_ref, h_ref, hw_ref, acc_ref,
                  *, n_layers, out_feats, fp, tm):
    """Fused JKNetConCat forward, grid = (n_layers + 1, n_row_blocks).

    adj_ref : (TM, N_pad)       bf16  streamed adjacency row block
    h0_ref  : (N_pad, fp)       bf16  padded input features (fetched once)
    w_ref   : (L, fp, fp)       bf16  padded hidden-layer weights (resident)
    b_ref   : (L, 1, fp)        f32   padded hidden-layer biases
    wf_ref  : (L*fp, fp)        bf16  padded, layer-block-structured final weight
    bf_ref  : (1, fp)           f32   padded final bias
    out_ref : (TM, fp)          f32   padded log_softmax output row block
    h_ref   : (N_pad, fp)       bf16  scratch: current layer activations
    hw_ref  : (N_pad, fp)       bf16  scratch: H@W (or JK projection) for this sweep
    acc_ref : (N_pad, fp)       f32   scratch: jumping-knowledge accumulator
    """
    l = pl.program_id(0)          # 0..n_layers-1 hidden sweeps, n_layers = final layer
    i = pl.program_id(1)          # adjacency row block within the sweep

    # ---- per-layer prologue: runs once per layer sweep (before any row block) ----
    @pl.when(jnp.logical_and(l == 0, i == 0))
    def _():
        h_ref[...] = h0_ref[...]
        acc_ref[...] = jnp.zeros_like(acc_ref)

    @pl.when(jnp.logical_and(i == 0, l < n_layers))
    def _():
        # HW = h_l @ W_l over the whole graph (N_pad x 128 @ 128 x 128, cheap).
        hw_ref[...] = jnp.dot(h_ref[...], w_ref[l],
                              preferred_element_type=jnp.float32).astype(jnp.bfloat16)

    @pl.when(jnp.logical_and(i == 0, l == n_layers))
    def _():
        # Final GraphConv input: the accumulated JK projection (replaces concat slab).
        hw_ref[...] = acc_ref[...].astype(jnp.bfloat16)

    # ---- row-block aggregation: agg = A[rows] @ HW  (K = N_pad, MXU well-shaped) ----
    agg = jnp.dot(adj_ref[...], hw_ref[...], preferred_element_type=jnp.float32)

    row0 = pl.multiple_of(i * tm, tm)

    @pl.when(l < n_layers)
    def _():
        # GraphConv with relu activation.
        h_new = jnp.maximum(agg + b_ref[l], 0.0).astype(jnp.bfloat16)
        h_ref[pl.ds(row0, tm), :] = h_new
        # JK concat folded into the final matmul: acc += h_l @ Wf[l-th row block].
        off = pl.multiple_of(l * fp, fp)
        acc_ref[pl.ds(row0, tm), :] += jnp.dot(
            h_new, wf_ref[pl.ds(off, fp), :], preferred_element_type=jnp.float32)
        # Keep the (revisited) output block deterministic; final sweep overwrites it.
        out_ref[...] = h_new.astype(out_ref.dtype)

    @pl.when(l == n_layers)
    def _():
        # Final GraphConv (no activation) + masked log_softmax (f32 throughout).
        z = agg + bf_ref[...]
        col = jax.lax.broadcasted_iota(jnp.int32, z.shape, 1)
        z = jnp.where(col < out_feats, z, -1e30)
        m = jnp.max(z, axis=-1, keepdims=True)
        s = z - m
        lse = jnp.log(jnp.sum(jnp.exp(s), axis=-1, keepdims=True))
        out_ref[...] = s - lse


# ----------------------------- host-side helpers -----------------------------

def _round_up(x, m):
    return (x + m - 1) // m * m


def _vmem_limit_bytes():
    """Generation-aware scoped-VMEM limit (~96 MiB v5e/v6e, ~48 MiB v7x)."""
    try:
        cap = int(pltpu.get_tpu_info().vmem_capacity_bytes)
    except Exception:
        cap = 64 * 1024 * 1024
    return min(cap * 3 // 4, 112 * 1024 * 1024)


def _choose_tiling(n, vmem_limit):
    """Pick (n_pad, tm, n_row_blocks). tm == n_pad means adj is VMEM-resident."""
    n8 = _round_up(max(n, 8), 8)
    adj_budget = int(vmem_limit * 0.6)           # budget for adjacency buffers
    if 2 * n8 * n8 * 2 <= adj_budget:            # full adj, double-buffered, bf16
        return n8, n8, 1
    tm = 512
    n_pad = _round_up(n, tm)
    while tm > 8 and 2 * tm * n_pad * 2 > adj_budget:
        tm //= 2
        n_pad = _round_up(n, tm)
    return n_pad, tm, n_pad // tm


def _pad2(x, rows, cols):
    return jnp.zeros((rows, cols), x.dtype).at[:x.shape[0], :x.shape[1]].set(x)


# ----------------------------- model wrapper --------------------------------

@jax.jit
def jknet_concat_forward(adj_norm, features, hidden_ws, hidden_bs,
                         final_w, final_b):
    """JKNetConCat forward (eval mode), fully fused into one pallas_call."""
    n, _ = features.shape
    n_layers = len(hidden_ws)
    n_units = hidden_ws[0].shape[1]
    out_feats = final_w.shape[1]
    fp = _FP

    vmem_limit = _vmem_limit_bytes()
    n_pad, tm, n_blocks = _choose_tiling(n, vmem_limit)

    # --- padding / re-layout / casts (jitted: fused & hoisted by XLA) --------
    adj_bf = _pad2(adj_norm, n_pad, n_pad).astype(jnp.bfloat16)
    h0 = _pad2(features, n_pad, fp).astype(jnp.bfloat16)
    w_stack = jnp.stack([_pad2(w, fp, fp) for w in hidden_ws]
                        ).astype(jnp.bfloat16)                     # (L, fp, fp)
    b_stack = jnp.stack([_pad2(b, 1, fp) for b in hidden_bs]
                        ).astype(jnp.float32)                      # (L, 1, fp)
    # Final weight: layer l's rows sit at [l*fp : l*fp + n_units] (rest zero),
    # so hcat @ Wf == sum_l h_l @ Wf[l*fp:(l+1)*fp].
    wf_pad = jnp.zeros((n_layers * fp, fp), jnp.float32)
    for l in range(n_layers):
        wf_pad = wf_pad.at[l * fp:l * fp + n_units, :out_feats].set(
            final_w[l * n_units:(l + 1) * n_units])
    wf_pad = wf_pad.astype(jnp.bfloat16)
    bf_pad = _pad2(final_b, 1, fp).astype(jnp.float32)

    kernel = functools.partial(_jknet_kernel, n_layers=n_layers,
                               out_feats=out_feats, fp=fp, tm=tm)

    # Advisory cost estimate for XLA's scheduler.
    adj_bytes = n_pad * n_pad * 2
    flops = 2 * (n_layers + 1) * n_pad * n_pad * fp + 4 * n_layers * n_pad * fp * fp
    bytes_accessed = (adj_bytes * ((n_layers + 1) if n_blocks > 1 else 1)
                      + h0.size * 2 + w_stack.size * 2 + wf_pad.size * 2
                      + (b_stack.size + bf_pad.size) * 4 + n_pad * fp * 4)

    out_pad = pl.pallas_call(
        kernel,
        out_shape=jax.ShapeDtypeStruct((n_pad, fp), jnp.float32),
        grid=(n_layers + 1, n_blocks),
        in_specs=[
            pl.BlockSpec((tm, n_pad), lambda l, i: (i, 0)),       # adj row blocks (streamed)
            pl.BlockSpec((n_pad, fp), lambda l, i: (0, 0)),       # features (fetched once)
            pl.BlockSpec(w_stack.shape, lambda l, i: (0, 0, 0)),  # hidden weights (resident)
            pl.BlockSpec(b_stack.shape, lambda l, i: (0, 0, 0)),  # hidden biases
            pl.BlockSpec(wf_pad.shape, lambda l, i: (0, 0)),      # final weight (resident)
            pl.BlockSpec(bf_pad.shape, lambda l, i: (0, 0)),      # final bias
        ],
        out_specs=pl.BlockSpec((tm, fp), lambda l, i: (i, 0)),
        scratch_shapes=[
            pltpu.VMEM((n_pad, fp), jnp.bfloat16),   # h_l
            pltpu.VMEM((n_pad, fp), jnp.bfloat16),   # H@W / JK projection (bf16 MXU operand)
            pltpu.VMEM((n_pad, fp), jnp.float32),    # JK accumulator (replaces concat slab)
        ],
        compiler_params=pltpu.CompilerParams(
            dimension_semantics=("arbitrary", "arbitrary"),
            vmem_limit_bytes=int(vmem_limit)),
        cost_estimate=pl.CostEstimate(flops=int(flops),
                                      transcendentals=int(n_pad * fp),
                                      bytes_accessed=int(bytes_accessed)),
    )(adj_bf, h0, w_stack, b_stack, wf_pad, bf_pad)

    return out_pad[:n, :out_feats]


# ----------------------------- references -----------------------------------

def jknet_concat_reference(adj, feats, ws, bs, wf, bfb, mxu_dtype=jnp.float32):
    """Pure-JAX reference.  mxu_dtype=bf16 mirrors the kernel's MXU precision."""
    a = adj.astype(mxu_dtype)
    h = feats.astype(mxu_dtype)
    outs = []
    for w, b in zip(ws, bs):
        hw = jnp.dot(h, w.astype(mxu_dtype), preferred_element_type=jnp.float32)
        agg = jnp.dot(a, hw.astype(mxu_dtype), preferred_element_type=jnp.float32)
        h = jnp.maximum(agg + b, 0.0).astype(mxu_dtype)
        outs.append(h)
    hcat = jnp.concatenate(outs, axis=1)
    hwf = jnp.dot(hcat, wf.astype(mxu_dtype), preferred_element_type=jnp.float32)
    z = jnp.dot(a, hwf.astype(mxu_dtype), preferred_element_type=jnp.float32) + bfb
    return jax.nn.log_softmax(z, axis=1)


# --------------------------------- main --------------------------------------

if __name__ == "__main__":
    key = jax.random.PRNGKey(0)

    # Small, JKNet-consistent sizes.
    n_nodes = 32
    in_feats = 16
    n_units = 32
    n_layers = 3
    out_feats = 8

    k_adj, k_feat, *k_ws = jax.random.split(key, 2 + n_layers + 1)

    # Random symmetric graph + symmetric normalization D^-1/2 A D^-1/2.
    a = (jax.random.uniform(k_adj, (n_nodes, n_nodes)) < 0.2).astype(jnp.float32)
    a = jnp.maximum(a, a.T)
    deg = jnp.clip(a.sum(axis=1), 1.0, None)
    d_inv_sqrt = 1.0 / jnp.sqrt(deg)
    adj_norm = (a * d_inv_sqrt[:, None]) * d_inv_sqrt[None, :]

    features = jax.random.normal(k_feat, (n_nodes, in_feats), dtype=jnp.float32)

    # GraphConv-shaped params: layer0 (in_feats, n_units), layers 1..L-1
    # (n_units, n_units), final (n_layers*n_units, out_feats); zero biases.
    hidden_ws, hidden_bs = [], []
    for i in range(n_layers):
        fin = in_feats if i == 0 else n_units
        w = 0.1 * jax.random.normal(k_ws[i], (fin, n_units), dtype=jnp.float32)
        hidden_ws.append(w)
        hidden_bs.append(jnp.zeros((1, n_units), dtype=jnp.float32))
    final_w = 0.1 * jax.random.normal(
        k_ws[n_layers], (n_layers * n_units, out_feats), dtype=jnp.float32)
    final_b = jnp.zeros((1, out_feats), dtype=jnp.float32)

    out = jknet_concat_forward(adj_norm, features, hidden_ws, hidden_bs,
                               final_w, final_b)
    out = jax.block_until_ready(out)
    assert out.shape == (n_nodes, out_feats)

    # Tight check against a reference using the same bf16-MXU / f32-accumulate math.
    ref_bf16 = jknet_concat_reference(adj_norm, features, hidden_ws, hidden_bs,
                                      final_w, final_b, mxu_dtype=jnp.bfloat16)
    assert jnp.allclose(out, ref_bf16, atol=2e-3, rtol=2e-3), (
        float(jnp.max(jnp.abs(out - ref_bf16))))

    # Looser check against the full-f32 semantics of the original module.
    ref_f32 = jknet_concat_reference(adj_norm, features, hidden_ws, hidden_bs,
                                     final_w, final_b, mxu_dtype=jnp.float32)
    assert jnp.allclose(out, ref_f32, atol=2e-2, rtol=2e-2), (
        float(jnp.max(jnp.abs(out - ref_f32))))

    print("KERNEL_OK")
</pallas_src>

<mosaic_0001>
module attributes {stable_mosaic.version = 11 : i64} {
  func.func @_jknet_kernel(%arg0: i32, %arg1: i32, %arg2: memref<32x32xbf16, #tpu.memory_space<vmem>>, %arg3: memref<32x128xbf16, #tpu.memory_space<vmem>>, %arg4: memref<3x128x128xbf16, #tpu.memory_space<vmem>>, %arg5: memref<3x1x128xf32, #tpu.memory_space<vmem>>, %arg6: memref<384x128xbf16, #tpu.memory_space<vmem>>, %arg7: memref<1x128xf32, #tpu.memory_space<vmem>>, %arg8: memref<32x128xf32, #tpu.memory_space<vmem>>, %arg9: memref<32x128xbf16, #tpu.memory_space<vmem>>, %arg10: memref<32x128xbf16, #tpu.memory_space<vmem>>, %arg11: memref<32x128xf32, #tpu.memory_space<vmem>>) attributes {dimension_semantics = [#tpu.dimension_semantics<arbitrary>, #tpu.dimension_semantics<arbitrary>], iteration_bounds = array<i64: 4, 1>, scalar_prefetch = 0 : i64, scratch_operands = 3 : i64, tpu.core_type = #tpu.core_type<tc>, window_params = [{transform_indices = @transform_0, window_bounds = array<i64: 32, 32>}, {pipeline_mode = #tpu.pipeline_mode<synchronous>, transform_indices = @transform_1, window_bounds = array<i64: 32, 128>}, {pipeline_mode = #tpu.pipeline_mode<synchronous>, transform_indices = @transform_2, window_bounds = array<i64: 3, 128, 128>}, {pipeline_mode = #tpu.pipeline_mode<synchronous>, transform_indices = @transform_3, window_bounds = array<i64: 3, 1, 128>}, {pipeline_mode = #tpu.pipeline_mode<synchronous>, transform_indices = @transform_4, window_bounds = array<i64: 384, 128>}, {pipeline_mode = #tpu.pipeline_mode<synchronous>, transform_indices = @transform_5, window_bounds = array<i64: 1, 128>}, {transform_indices = @transform_6, window_bounds = array<i64: 32, 128>}]} {
    %c0_i32 = arith.constant 0 : i32
    %0 = arith.cmpi eq, %arg0, %c0_i32 : i32
    %c0_i32_0 = arith.constant 0 : i32
    %1 = arith.cmpi eq, %arg1, %c0_i32_0 : i32
    %2 = arith.andi %0, %1 : i1
    %3 = arith.extui %2 : i1 to i32
    %c0_i32_1 = arith.constant 0 : i32
    %4 = arith.cmpi ne, %3, %c0_i32_1 : i32
    scf.if %4 {
      %c0_14 = arith.constant 0 : index
      %c0_15 = arith.constant 0 : index
      %26 = vector.load %arg3[%c0_14, %c0_15] : memref<32x128xbf16, #tpu.memory_space<vmem>>, vector<32x128xbf16>
      %c0_16 = arith.constant 0 : index
      %c0_17 = arith.constant 0 : index
      %27 = vector.load %arg9[%c0_16, %c0_17] : memref<32x128xbf16, #tpu.memory_space<vmem>>, vector<32x128xbf16>
      tpu.vector_store %arg9[%c0_16, %c0_17], %26 {strides = array<i32>} : memref<32x128xbf16, #tpu.memory_space<vmem>>, vector<32x128xbf16>,
      %cst_18 = arith.constant 0.000000e+00 : f32
      %28 = vector.broadcast %cst_18 : f32 to vector<32x128xf32>
      %c0_19 = arith.constant 0 : index
      %c0_20 = arith.constant 0 : index
      %29 = vector.load %arg11[%c0_19, %c0_20] : memref<32x128xf32, #tpu.memory_space<vmem>>, vector<32x128xf32>
      tpu.vector_store %arg11[%c0_19, %c0_20], %28 {strides = array<i32>} : memref<32x128xf32, #tpu.memory_space<vmem>>, vector<32x128xf32>,
    } else {
    }
    %c0_i32_2 = arith.constant 0 : i32
    %5 = arith.cmpi eq, %arg1, %c0_i32_2 : i32
    %c3_i32 = arith.constant 3 : i32
    %6 = arith.cmpi slt, %arg0, %c3_i32 : i32
    %7 = arith.andi %5, %6 : i1
    %8 = arith.extui %7 : i1 to i32
    %c0_i32_3 = arith.constant 0 : i32
    %9 = arith.cmpi ne, %8, %c0_i32_3 : i32
    scf.if %9 {
      %c0_14 = arith.constant 0 : index
      %c0_15 = arith.constant 0 : index
      %26 = vector.load %arg9[%c0_14, %c0_15] : memref<32x128xbf16, #tpu.memory_space<vmem>>, vector<32x128xbf16>
      %27 = arith.index_cast %arg0 : i32 to index
      %c0_16 = arith.constant 0 : index
      %c0_17 = arith.constant 0 : index
      %28 = vector.load %arg4[%27, %c0_16, %c0_17] : memref<3x128x128xbf16, #tpu.memory_space<vmem>>, vector<1x128x128xbf16>
      %29 = vector.shape_cast %28 : vector<1x128x128xbf16> to vector<128x128xbf16>
      %cst_18 = arith.constant dense<0.000000e+00> : vector<32x128xf32>
      %30 = tpu.matmul %26, %29, %cst_18 {dimension_numbers = #tpu.dot_dimension_numbers<[1], [0], [0], [1], [0, 0, 1, 1], [], []>} : vector<32x128xbf16>, vector<128x128xbf16>, vector<32x128xf32> -> vector<32x128xf32>
      %31 = arith.truncf %30 : vector<32x128xf32> to vector<32x128xbf16>
      %c0_19 = arith.constant 0 : index
      %c0_20 = arith.constant 0 : index
      %32 = vector.load %arg10[%c0_19, %c0_20] : memref<32x128xbf16, #tpu.memory_space<vmem>>, vector<32x128xbf16>
      tpu.vector_store %arg10[%c0_19, %c0_20], %31 {strides = array<i32>} : memref<32x128xbf16, #tpu.memory_space<vmem>>, vector<32x128xbf16>,
    } else {
    }
    %c0_i32_4 = arith.constant 0 : i32
    %10 = arith.cmpi eq, %arg1, %c0_i32_4 : i32
    %c3_i32_5 = arith.constant 3 : i32
    %11 = arith.cmpi eq, %arg0, %c3_i32_5 : i32
    %12 = arith.andi %10, %11 : i1
    %13 = arith.extui %12 : i1 to i32
    %c0_i32_6 = arith.constant 0 : i32
    %14 = arith.cmpi ne, %13, %c0_i32_6 : i32
    scf.if %14 {
      %c0_14 = arith.constant 0 : index
      %c0_15 = arith.constant 0 : index
      %26 = vector.load %arg11[%c0_14, %c0_15] : memref<32x128xf32, #tpu.memory_space<vmem>>, vector<32x128xf32>
      %27 = arith.truncf %26 : vector<32x128xf32> to vector<32x128xbf16>
      %c0_16 = arith.constant 0 : index
      %c0_17 = arith.constant 0 : index
      %28 = vector.load %arg10[%c0_16, %c0_17] : memref<32x128xbf16, #tpu.memory_space<vmem>>, vector<32x128xbf16>
      tpu.vector_store %arg10[%c0_16, %c0_17], %27 {strides = array<i32>} : memref<32x128xbf16, #tpu.memory_space<vmem>>, vector<32x128xbf16>,
    } else {
    }
    %c0 = arith.constant 0 : index
    %c0_7 = arith.constant 0 : index
    %15 = vector.load %arg2[%c0, %c0_7] : memref<32x32xbf16, #tpu.memory_space<vmem>>, vector<32x32xbf16>
    %c0_8 = arith.constant 0 : index
    %c0_9 = arith.constant 0 : index
    %16 = vector.load %arg10[%c0_8, %c0_9] : memref<32x128xbf16, #tpu.memory_space<vmem>>, vector<32x128xbf16>
    %cst = arith.constant dense<0.000000e+00> : vector<32x128xf32>
    %17 = tpu.matmul %15, %16, %cst {dimension_numbers = #tpu.dot_dimension_numbers<[1], [0], [0], [1], [0, 0, 1, 1], [], []>} : vector<32x32xbf16>, vector<32x128xbf16>, vector<32x128xf32> -> vector<32x128xf32>
    %c32_i32 = arith.constant 32 : i32
    %18 = arith.muli %arg1, %c32_i32 : i32
    %19 = tpu.assume_multiple %18, 32 : i32
    %c3_i32_10 = arith.constant 3 : i32
    %20 = arith.cmpi slt, %arg0, %c3_i32_10 : i32
    %21 = arith.extui %20 : i1 to i32
    %c0_i32_11 = arith.constant 0 : i32
    %22 = arith.cmpi ne, %21, %c0_i32_11 : i32
    scf.if %22 {
      %26 = arith.index_cast %arg0 : i32 to index
      %c0_14 = arith.constant 0 : index
      %c0_15 = arith.constant 0 : index
      %27 = vector.load %arg5[%26, %c0_14, %c0_15] : memref<3x1x128xf32, #tpu.memory_space<vmem>>, vector<1x1x128xf32>
      %28 = vector.shape_cast %27 : vector<1x1x128xf32> to vector<1x128xf32>
      %29 = vector.broadcast %28 : vector<1x128xf32> to vector<32x128xf32>
      %30 = arith.addf %17, %29 : vector<32x128xf32>
      %cst_16 = arith.constant 0.000000e+00 : f32
      %31 = vector.broadcast %cst_16 : f32 to vector<32x128xf32>
      %32 = arith.maximumf %30, %31 : vector<32x128xf32>
      %33 = arith.truncf %32 : vector<32x128xf32> to vector<32x128xbf16>
      %34 = arith.index_cast %19 : i32 to index
      %c0_17 = arith.constant 0 : index
      %35 = vector.load %arg9[%34, %c0_17] : memref<32x128xbf16, #tpu.memory_space<vmem>>, vector<32x128xbf16>
      tpu.vector_store %arg9[%34, %c0_17], %33 {strides = array<i32>} : memref<32x128xbf16, #tpu.memory_space<vmem>>, vector<32x128xbf16>,
      %c128_i32 = arith.constant 128 : i32
      %36 = arith.muli %arg0, %c128_i32 : i32
      %37 = tpu.assume_multiple %36, 128 : i32
      %38 = arith.index_cast %19 : i32 to index
      %c0_18 = arith.constant 0 : index
      %39 = vector.load %arg11[%38, %c0_18] : memref<32x128xf32, #tpu.memory_space<vmem>>, vector<32x128xf32>
      %40 = arith.index_cast %37 : i32 to index
      %c0_19 = arith.constant 0 : index
      %41 = vector.load %arg6[%40, %c0_19] : memref<384x128xbf16, #tpu.memory_space<vmem>>, vector<128x128xbf16>
      %cst_20 = arith.constant dense<0.000000e+00> : vector<32x128xf32>
      %42 = tpu.matmul %33, %41, %cst_20 {dimension_numbers = #tpu.dot_dimension_numbers<[1], [0], [0], [1], [0, 0, 1, 1], [], []>} : vector<32x128xbf16>, vector<128x128xbf16>, vector<32x128xf32> -> vector<32x128xf32>
      %43 = arith.addf %39, %42 : vector<32x128xf32>
      %44 = arith.index_cast %19 : i32 to index
      %c0_21 = arith.constant 0 : index
      %45 = vector.load %arg11[%44, %c0_21] : memref<32x128xf32, #tpu.memory_space<vmem>>, vector<32x128xf32>
      tpu.vector_store %arg11[%44, %c0_21], %43 {strides = array<i32>} : memref<32x128xf32, #tpu.memory_space<vmem>>, vector<32x128xf32>,
      %46 = arith.extf %33 : vector<32x128xbf16> to vector<32x128xf32>
      %c0_22 = arith.constant 0 : index
      %c0_23 = arith.constant 0 : index
      %47 = vector.load %arg8[%c0_22, %c0_23] : memref<32x128xf32, #tpu.memory_space<vmem>>, vector<32x128xf32>
      tpu.vector_store %arg8[%c0_22, %c0_23], %46 {strides = array<i32>} : memref<32x128xf32, #tpu.memory_space<vmem>>, vector<32x128xf32>,
    } else {
    }
    %c3_i32_12 = arith.constant 3 : i32
    %23 = arith.cmpi eq, %arg0, %c3_i32_12 : i32
    %24 = arith.extui %23 : i1 to i32
    %c0_i32_13 = arith.constant 0 : i32
    %25 = arith.cmpi ne, %24, %c0_i32_13 : i32
    scf.if %25 {
      %c0_14 = arith.constant 0 : index
      %c0_15 = arith.constant 0 : index
      %26 = vector.load %arg7[%c0_14, %c0_15] : memref<1x128xf32, #tpu.memory_space<vmem>>, vector<1x128xf32>
      %27 = vector.broadcast %26 : vector<1x128xf32> to vector<32x128xf32>
      %28 = arith.addf %17, %27 : vector<32x128xf32>
      %29 = tpu.iota {dimensions = array<i32: 1>} : vector<32x128xi32>
      %c8_i32 = arith.constant 8 : i32
      %30 = vector.broadcast %c8_i32 : i32 to vector<32x128xi32>
      %31 = arith.cmpi slt, %29, %30 : vector<32x128xi32>
      %cst_16 = arith.constant -1.000000e+30 : f32
      %32 = vector.broadcast %cst_16 : f32 to vector<32x128xf32>
      %33 = arith.select %31, %28, %32 : vector<32x128xi1>, vector<32x128xf32>
      %cst_17 = arith.constant dense<0xFF800000> : vector<32xf32>
      %34 = vector.multi_reduction <maximumf>, %33, %cst_17 [1] : vector<32x128xf32> to vector<32xf32>
      %35 = vector.shape_cast %34 : vector<32xf32> to vector<32x1xf32>
      %36 = vector.broadcast %35 : vector<32x1xf32> to vector<32x128xf32>
      %37 = arith.subf %33, %36 : vector<32x128xf32>
      %38 = math.exp %37 : vector<32x128xf32>
      %cst_18 = arith.constant dense<0.000000e+00> : vector<32xf32>
      %39 = vector.multi_reduction <add>, %38, %cst_18 [1] : vector<32x128xf32> to vector<32xf32>
      %40 = vector.shape_cast %39 : vector<32xf32> to vector<32x1xf32>
      %41 = math.log %40 : vector<32x1xf32>
      %42 = vector.broadcast %41 : vector<32x1xf32> to vector<32x128xf32>
      %43 = arith.subf %37, %42 : vector<32x128xf32>
      %c0_19 = arith.constant 0 : index
      %c0_20 = arith.constant 0 : index
      %44 = vector.load %arg8[%c0_19, %c0_20] : memref<32x128xf32, #tpu.memory_space<vmem>>, vector<32x128xf32>
      tpu.vector_store %arg8[%c0_19, %c0_20], %43 {strides = array<i32>} : memref<32x128xf32, #tpu.memory_space<vmem>>, vector<32x128xf32>,
    } else {
    }
    return
  }
  func.func @transform_0(%arg0: i32, %arg1: i32) -> (i32, i32) {
    %c0_i32 = arith.constant 0 : i32
    %c0_i32_0 = arith.constant 0 : i32
    return %arg1, %c0_i32 : i32, i32
  }
  func.func @transform_1(%arg0: i32, %arg1: i32) -> (i32, i32) {
    %c0_i32 = arith.constant 0 : i32
    %c0_i32_0 = arith.constant 0 : i32
    %c0_i32_1 = arith.constant 0 : i32
    return %c0_i32, %c0_i32_0 : i32, i32
  }
  func.func @transform_2(%arg0: i32, %arg1: i32) -> (i32, i32, i32) {
    %c0_i32 = arith.constant 0 : i32
    %c0_i32_0 = arith.constant 0 : i32
    %c0_i32_1 = arith.constant 0 : i32
    %c0_i32_2 = arith.constant 0 : i32
    return %c0_i32, %c0_i32_0, %c0_i32_1 : i32, i32, i32
  }
  func.func @transform_3(%arg0: i32, %arg1: i32) -> (i32, i32, i32) {
    %c0_i32 = arith.constant 0 : i32
    %c0_i32_0 = arith.constant 0 : i32
    %c0_i32_1 = arith.constant 0 : i32
    %c0_i32_2 = arith.constant 0 : i32
    return %c0_i32, %c0_i32_0, %c0_i32_1 : i32, i32, i32
  }
  func.func @transform_4(%arg0: i32, %arg1: i32) -> (i32, i32) {
    %c0_i32 = arith.constant 0 : i32
    %c0_i32_0 = arith.constant 0 : i32
    %c0_i32_1 = arith.constant 0 : i32
    return %c0_i32, %c0_i32_0 : i32, i32
  }
  func.func @transform_5(%arg0: i32, %arg1: i32) -> (i32, i32) {
    %c0_i32 = arith.constant 0 : i32
    %c0_i32_0 = arith.constant 0 : i32
    %c0_i32_1 = arith.constant 0 : i32
    return %c0_i32, %c0_i32_0 : i32, i32
  }
  func.func @transform_6(%arg0: i32, %arg1: i32) -> (i32, i32) {
    %c0_i32 = arith.constant 0 : i32
    %c0_i32_0 = arith.constant 0 : i32
    return %arg1, %c0_i32 : i32, i32
  }
}

</mosaic_0001>

<llo_original>
// kernel: jknet_concat_forward.1
$region0: #{jknet_concat_forward.1}
  #allocation0 [shape = 'u32[]', space=smem, size = 0x4, offset = 0x4, fixed_abs, tag = 'smem constant byte address 0x4 - core index']
  #allocation1 [shape = 'u32[144,128]{1,0:T(1,128)}', space=vmem, size = 0x12000, scoped, tag = 'internal scratch']
  #allocation2 [shape = 'bf16[32,128]{1,0:T(8,128)(2,1)}', space=vmem, size = 0x2000, scoped, tag = 'scratch operand']
  #allocation3 [shape = 'bf16[32,128]{1,0:T(8,128)(2,1)}', space=vmem, size = 0x2000, scoped, tag = 'scratch operand']
  #allocation4 [shape = 'f32[32,128]{1,0:T(8,128)}', space=vmem, size = 0x4000, scoped, tag = 'scratch operand']
  %s0 = inlined_call_operand.vmem [shape: bf16[32,32], index: 0, kind: input, shape index: {}]
  %s1 = inlined_call_operand.vmem [shape: bf16[32,128], index: 1, kind: input, shape index: {}]
  %s2 = inlined_call_operand.vmem [shape: bf16[3,128,128], index: 2, kind: input, shape index: {}]
  %s3 = inlined_call_operand.vmem [shape: f32[3,1,128], index: 3, kind: input, shape index: {}]
  %s4 = inlined_call_operand.vmem [shape: bf16[384,128], index: 4, kind: input, shape index: {}]
  %s5 = inlined_call_operand.vmem [shape: f32[1,128], index: 5, kind: input, shape index: {}]
  %s6 = inlined_call_operand.vmem [shape: f32[32,128], index: 6, kind: output, shape index: {}]
  %s7 = sld [smem:[#allocation0]]
  $region77: #{jknet_concat_forward.1} parent=0
    _
  %s9 = ssub.s32 1, %s7
  %s10 = scalar_select 0, %s9, %s7
  loop: start=0, step=1, limit=6
  $region2: #{jknet_concat_forward.1} parent=0 // loop_pre_header
    _
  $region3: #{jknet_concat_forward.1} parent=0 // loop_header
    %s12 = sphi 0, %s16
    %p13 = scmp.ge.s32.totalorder %s12, 6
    %s19 = sphi 0, %s31
    %s20 = sphi 0, %s27
    %s21 = sphi 0, %s19
    %s22 = sphi 0, %s20
    %s23 = sphi 0, %s21
    %s24 = sphi 0, %s22
    %s34 = sphi 0, %s36
    %s37 = sphi 0, %s34
    %s38 = sphi 0, %s37
    %s54 = sphi 0, %s38
    %s58 = sphi 0, %s58
    %s60 = sphi 0, %s58
    %s61 = sphi 0, %s60
    %s75 = sphi 0, %s61
    %s79 = sphi 0, %s79
    %s81 = sphi 0, %s79
    %s82 = sphi 0, %s81
    %s96 = sphi 0, %s82
    %s100 = sphi 0, %s100
    %s102 = sphi 0, %s100
    %s103 = sphi 0, %s102
    %s117 = sphi 0, %s103
    %s121 = sphi 0, %s121
    %s123 = sphi 0, %s121
    %s124 = sphi 0, %s123
    %s138 = sphi 0, %s124
    %s142 = sphi 0, %s142
    %s144 = sphi 0, %s142
    %s145 = sphi 0, %s144
    %s159 = sphi 0, %s145
    %s165 = sphi 0, %s167
    %s168 = sphi 0, %s165
    %s169 = sphi 0, %s168
    %s185 = sphi 0, %s169
  $region4: #{jknet_concat_forward.1} parent=0 // loop_header_branch
    %15 = sbr.rel (%p13) target = $region8
  $region5: #{jknet_concat_forward.1} parent=0 // loop_body
    %s17 = ssub.s32 %s12, 1
    %s18 = ssub.s32 %s12, 2
    %s25 = sadd.s32 1, %s20
    %p26 = scmp.ge.s32.totalorder %s25, 1
    %s27 = scalar_select %p26, 0, %s25
    %s28 = sadd.s32 1, %s19
    %s29 = scalar_select %p26, %s28, %s19
    %p30 = scmp.ge.s32.totalorder %s29, 4
    %s31 = scalar_select %p30, 0, %s29
    %s32 = ssub.s32 %s20, %s27
    %p33 = scmp.eq.s32.totalorder %s32, 0
    %s35 = sadd.s32 %s34, 1
    %s36 = scalar_select %p33, %s34, %s35
    %p39 = pneg %p33
    %p40 = scmp.eq.s32.totalorder %s12, 3
    %p41 = por %p39, %p40
    %p42 = scmp.ne.s32.totalorder %s34, %s37
    %p43 = scmp.eq.s32.totalorder %s12, 0
    %p44 = por %p42, %p43
    %p45 = scmp.ne.s32.totalorder %s34, %s37
    %p46 = scmp.eq.s32.totalorder %s17, 3
    %p47 = por %p45, %p46
    %p48 = scmp.ne.s32.totalorder %s37, %s38
    %p49 = scmp.eq.s32.totalorder %s17, 0
    %p50 = por %p48, %p49
    %p51 = scmp.ne.s32.totalorder %s37, %s38
    %p52 = scmp.eq.s32.totalorder %s18, 3
    %p53 = por %p51, %p52
    %p55 = scmp.ne.s32.totalorder %s38, %s54
    %p56 = scmp.eq.s32.totalorder %s18, 0
    %p57 = por %p55, %p56
    %s59 = sadd.s32 %s58, 1
    %p62 = scmp.eq.s32.totalorder %s12, 3
    %p63 = scmp.ne.s32.totalorder %s58, %s60
    %p64 = scmp.eq.s32.totalorder %s12, 0
    %p65 = por %p63, %p64
    %p66 = scmp.ne.s32.totalorder %s58, %s60
    %p67 = scmp.eq.s32.totalorder %s17, 3
    %p68 = por %p66, %p67
    %p69 = scmp.ne.s32.totalorder %s60, %s61
    %p70 = scmp.eq.s32.totalorder %s17, 0
    %p71 = por %p69, %p70
    %p72 = scmp.ne.s32.totalorder %s60, %s61
    %p73 = scmp.eq.s32.totalorder %s18, 3
    %p74 = por %p72, %p73
    %p76 = scmp.ne.s32.totalorder %s61, %s75
    %p77 = scmp.eq.s32.totalorder %s18, 0
    %p78 = por %p76, %p77
    %s80 = sadd.s32 %s79, 1
    %p83 = scmp.eq.s32.totalorder %s12, 3
    %p84 = scmp.ne.s32.totalorder %s79, %s81
    %p85 = scmp.eq.s32.totalorder %s12, 0
    %p86 = por %p84, %p85
    %p87 = scmp.ne.s32.totalorder %s79, %s81
    %p88 = scmp.eq.s32.totalorder %s17, 3
    %p89 = por %p87, %p88
    %p90 = scmp.ne.s32.totalorder %s81, %s82
    %p91 = scmp.eq.s32.totalorder %s17, 0
    %p92 = por %p90, %p91
    %p93 = scmp.ne.s32.totalorder %s81, %s82
    %p94 = scmp.eq.s32.totalorder %s18, 3
    %p95 = por %p93, %p94
    %p97 = scmp.ne.s32.totalorder %s82, %s96
    %p98 = scmp.eq.s32.totalorder %s18, 0
    %p99 = por %p97, %p98
    %s101 = sadd.s32 %s100, 1
    %p104 = scmp.eq.s32.totalorder %s12, 3
    %p105 = scmp.ne.s32.totalorder %s100, %s102
    %p106 = scmp.eq.s32.totalorder %s12, 0
    %p107 = por %p105, %p106
    %p108 = scmp.ne.s32.totalorder %s100, %s102
    %p109 = scmp.eq.s32.totalorder %s17, 3
    %p110 = por %p108, %p109
    %p111 = scmp.ne.s32.totalorder %s102, %s103
    %p112 = scmp.eq.s32.totalorder %s17, 0
    %p113 = por %p111, %p112
    %p114 = scmp.ne.s32.totalorder %s102, %s103
    %p115 = scmp.eq.s32.totalorder %s18, 3
    %p116 = por %p114, %p115
    %p118 = scmp.ne.s32.totalorder %s103, %s117
    %p119 = scmp.eq.s32.totalorder %s18, 0
    %p120 = por %p118, %p119
    %s122 = sadd.s32 %s121, 1
    %p125 = scmp.eq.s32.totalorder %s12, 3
    %p126 = scmp.ne.s32.totalorder %s121, %s123
    %p127 = scmp.eq.s32.totalorder %s12, 0
    %p128 = por %p126, %p127
    %p129 = scmp.ne.s32.totalorder %s121, %s123
    %p130 = scmp.eq.s32.totalorder %s17, 3
    %p131 = por %p129, %p130
    %p132 = scmp.ne.s32.totalorder %s123, %s124
    %p133 = scmp.eq.s32.totalorder %s17, 0
    %p134 = por %p132, %p133
    %p135 = scmp.ne.s32.totalorder %s123, %s124
    %p136 = scmp.eq.s32.totalorder %s18, 3
    %p137 = por %p135, %p136
    %p139 = scmp.ne.s32.totalorder %s124, %s138
    %p140 = scmp.eq.s32.totalorder %s18, 0
    %p141 = por %p139, %p140
    %s143 = sadd.s32 %s142, 1
    %p146 = scmp.eq.s32.totalorder %s12, 3
    %p147 = scmp.ne.s32.totalorder %s142, %s144
    %p148 = scmp.eq.s32.totalorder %s12, 0
    %p149 = por %p147, %p148
    %p150 = scmp.ne.s32.totalorder %s142, %s144
    %p151 = scmp.eq.s32.totalorder %s17, 3
    %p152 = por %p150, %p151
    %p153 = scmp.ne.s32.totalorder %s144, %s145
    %p154 = scmp.eq.s32.totalorder %s17, 0
    %p155 = por %p153, %p154
    %p156 = scmp.ne.s32.totalorder %s144, %s145
    %p157 = scmp.eq.s32.totalorder %s18, 3
    %p158 = por %p156, %p157
    %p160 = scmp.ne.s32.totalorder %s145, %s159
    %p161 = scmp.eq.s32.totalorder %s18, 0
    %p162 = por %p160, %p161
    %s163 = ssub.s32 %s20, %s27
    %p164 = scmp.eq.s32.totalorder %s163, 0
    %s166 = sadd.s32 %s165, 1
    %s167 = scalar_select %p164, %s165, %s166
    %p170 = pneg %p164
    %p171 = scmp.eq.s32.totalorder %s12, 3
    %p172 = por %p170, %p171
    %p173 = scmp.ne.s32.totalorder %s165, %s168
    %p174 = scmp.eq.s32.totalorder %s12, 0
    %p175 = por %p173, %p174
    %p176 = scmp.ne.s32.totalorder %s165, %s168
    %p177 = scmp.eq.s32.totalorder %s17, 3
    %p178 = por %p176, %p177
    %p179 = scmp.ne.s32.totalorder %s168, %s169
    %p180 = scmp.eq.s32.totalorder %s17, 0
    %p181 = por %p179, %p180
    %p182 = scmp.ne.s32.totalorder %s168, %s169
    %p183 = scmp.eq.s32.totalorder %s18, 3
    %p184 = por %p182, %p183
    %p186 = scmp.ne.s32.totalorder %s169, %s185
    %p187 = scmp.eq.s32.totalorder %s18, 0
    %p188 = por %p186, %p187
    %p189 = scmp.le.s32.totalorder 1, %s12
    %p190 = scmp.lt.s32.totalorder %s12, 5
    %p191 = pnand %p189, %p190
    %p192 = pneg %p191
    // Predicated region
    $region9: #{jknet_concat_forward.1} parent=5 // pred_check
      _
    $region10: #{jknet_concat_forward.1} parent=5 // pred_check_branch
      %194 = sbr.rel (%p191) target = $region12
    $region11: #{jknet_concat_forward.1} parent=5 // pred_region
      %s195 = ssub.s32 %s12, 1
      // Predicated region
      $region13: #{jknet_concat_forward.1} parent=11 // pred_check
        %p196 = pneg %p50
      $region14: #{jknet_concat_forward.1} parent=11 // pred_check_branch
        %198 = sbr.rel (%p196) target = $region16
      $region15: #{jknet_concat_forward.1} parent=11 // pred_region
        %s199 = smul.u32 4, %s22
        %p200 = scmp.lt.s32.totalorder %s199, 3
        %s201 = scalar_select %p200, %s199, 3
        %s202 = smul.addr %s201, 4
        %s203 = scalar_lea.vmem %s0, %s202
        %s204 = smul.u32 4, %s22
      $region16: #{jknet_concat_forward.1} parent=11 // pred_fallthru
        _
      // Predicated region
      $region17: #{jknet_concat_forward.1} parent=11 // pred_check
        %p205 = pneg %p71
      $region18: #{jknet_concat_forward.1} parent=11 // pred_check_branch
        %207 = sbr.rel (%p205) target = $region20
      $region19: #{jknet_concat_forward.1} parent=11 // pred_region
        _
      $region20: #{jknet_concat_forward.1} parent=11 // pred_fallthru
        _
      // Predicated region
      $region21: #{jknet_concat_forward.1} parent=11 // pred_check
        %p208 = pneg %p92
      $region22: #{jknet_concat_forward.1} parent=11 // pred_check_branch
        %210 = sbr.rel (%p208) target = $region24
      $region23: #{jknet_concat_forward.1} parent=11 // pred_region
        _
      $region24: #{jknet_concat_forward.1} parent=11 // pred_fallthru
        _
      // Predicated region
      $region25: #{jknet_concat_forward.1} parent=11 // pred_check
        %p211 = pneg %p113
      $region26: #{jknet_concat_forward.1} parent=11 // pred_check_branch
        %213 = sbr.rel (%p211) target = $region28
      $region27: #{jknet_concat_forward.1} parent=11 // pred_region
        _
      $region28: #{jknet_concat_forward.1} parent=11 // pred_fallthru
        _
      // Predicated region
      $region29: #{jknet_concat_forward.1} parent=11 // pred_check
        %p214 = pneg %p134
      $region30: #{jknet_concat_forward.1} parent=11 // pred_check_branch
        %216 = sbr.rel (%p214) target = $region32
      $region31: #{jknet_concat_forward.1} parent=11 // pred_region
        _
      $region32: #{jknet_concat_forward.1} parent=11 // pred_fallthru
        _
      // Predicated region
      $region33: #{jknet_concat_forward.1} parent=11 // pred_check
        %p217 = pneg %p155
      $region34: #{jknet_concat_forward.1} parent=11 // pred_check_branch
        %219 = sbr.rel (%p217) target = $region36
      $region35: #{jknet_concat_forward.1} parent=11 // pred_region
        _
      $region36: #{jknet_concat_forward.1} parent=11 // pred_fallthru
        _
    $region12: #{jknet_concat_forward.1} parent=5 // pred_fallthru
      _
    %p220 = scmp.lt.s32.totalorder %s12, 4
    // Predicated region
    $region37: #{jknet_concat_forward.1} parent=5 // pred_check
      %p221 = pneg %p220
    $region38: #{jknet_concat_forward.1} parent=5 // pred_check_branch
      %223 = sbr.rel (%p221) target = $region40
    $region39: #{jknet_concat_forward.1} parent=5 // pred_region
      _
    $region40: #{jknet_concat_forward.1} parent=5 // pred_fallthru
      _
    %p224 = scmp.le.s32.totalorder 1, %s12
    %p225 = scmp.lt.s32.totalorder %s12, 5
    %p226 = pnand %p224, %p225
    %p227 = pneg %p226
    // Predicated region
    $region41: #{jknet_concat_forward.1} parent=5 // pred_check
      _
    $region42: #{jknet_concat_forward.1} parent=5 // pred_check_branch
      %229 = sbr.rel (%p226) target = $region44
    $region43: #{jknet_concat_forward.1} parent=5 // pred_region
      %s230 = ssub.s32 %s12, 1
      %s231 = smul.u32 4, %s22
      %p232 = scmp.lt.s32.totalorder %s231, 3
      %s233 = scalar_select %p232, %s231, 3
      %s234 = smul.addr %s233, 4
      %s235 = scalar_lea.vmem %s0, %s234
      %p236 = pneg %p50
      %p237 = pneg %p47
      %p238 = pneg %p71
      %p239 = pneg %p68
      %p240 = pneg %p92
      %p241 = pneg %p89
      %p242 = pneg %p113
      %p243 = pneg %p110
      %p244 = pneg %p134
      %p245 = pneg %p131
      %p246 = pneg %p155
      %p247 = pneg %p152
      %p248 = pneg %p181
      %p249 = pneg %p178
      %s250 = smul.u32 4, %s22
      %p251 = scmp.lt.s32.totalorder %s250, 3
      %s252 = scalar_select %p251, %s250, 3
      %s253 = smul.addr %s252, 8
      %s254 = scalar_lea.vmem %s6, %s253
      %s255 = smul.u32 4, %s22
      %p256 = scmp.lt.s32.totalorder %s255, 3
      %s257 = scalar_select %p256, %s255, 3
      %s258 = smul.addr %s257, 4
      %s259 = scalar_lea.vmem %s0, %s258
      %s260 = smul.u32 4, %s22
      %s261 = smul.u32 4, %s22
      %p262 = scmp.lt.s32.totalorder %s261, 3
      %s263 = scalar_select %p262, %s261, 3
      %s264 = smul.addr %s263, 8
      %s265 = scalar_lea.vmem %s6, %s264
      %s266 = smul.u32 4, %s22
      %p268 = scmp.eq.s32.totalorder %s21, 0
      %p269 = scmp.eq.s32.totalorder %s22, 0
      %p270 = pnand %p268, %p269
      %p271 = pneg %p270
      // Predicated region
      $region45: #{jknet_concat_forward.1} parent=43 // pred_check
        _
      $region46: #{jknet_concat_forward.1} parent=43 // pred_check_branch
        %273 = sbr.rel (%p270) target = $region48
      $region47: #{jknet_concat_forward.1} parent=43 // pred_region
        %v274 = vld [vmem:[%s1] sm:$0xf]
        %v275 = vld [vmem:[%s1 + $0x4] sm:$0xf]
        %v276 = vld [vmem:[%s1 + $0x8] sm:$0xf]
        %v277 = vld [vmem:[%s1 + $0xc] sm:$0xf]
        %278 = vst [vmem:[#allocation2] sm:$0xf] %v274
        %279 = vst [vmem:[#allocation2 + $0x4] sm:$0xf] %v275
        %280 = vst [vmem:[#allocation2 + $0x8] sm:$0xf] %v276
        %281 = vst [vmem:[#allocation2 + $0xc] sm:$0xf] %v277
        %282 = vst [vmem:[#allocation4] sm:$0xff] 0.0
        %283 = vst [vmem:[#allocation4 + $0x8] sm:$0xff] 0.0
        %284 = vst [vmem:[#allocation4 + $0x10] sm:$0xff] 0.0
        %285 = vst [vmem:[#allocation4 + $0x18] sm:$0xff] 0.0
      $region48: #{jknet_concat_forward.1} parent=43 // pred_fallthru
        _
      %p286 = scmp.lt.s32.totalorder %s21, 3
      %p287 = pnand %p269, %p286
      %p288 = pneg %p287
      // Predicated region
      $region49: #{jknet_concat_forward.1} parent=43 // pred_check
        _
      $region50: #{jknet_concat_forward.1} parent=43 // pred_check_branch
        %290 = sbr.rel (%p287) target = $region52
      $region51: #{jknet_concat_forward.1} parent=43 // pred_region
        %v291 = vld [vmem:[#allocation2] sm:$0xf]
        %v292 = vld [vmem:[#allocation2 + $0x4] sm:$0xf]
        %v293 = vld [vmem:[#allocation2 + $0x8] sm:$0xf]
        %v294 = vld [vmem:[#allocation2 + $0xc] sm:$0xf]
        %s295 = smul.u32 %s21, 16
        %s296 = smul.addr %s295, 4
        %s297 = scalar_lea.vmem %s2, %s296
        %v298 = vld [vmem:[%s297] sm:$0xf]
        %v299 = vld [vmem:[%s297 + $0x4] sm:$0xf]
        %v300 = vld [vmem:[%s297 + $0x8] sm:$0xf]
        %v301 = vld [vmem:[%s297 + $0xc] sm:$0xf]
        %v302 = vld [vmem:[%s297 + $0x10] sm:$0xf]
        %v303 = vld [vmem:[%s297 + $0x14] sm:$0xf]
        %v304 = vld [vmem:[%s297 + $0x18] sm:$0xf]
        %v305 = vld [vmem:[%s297 + $0x1c] sm:$0xf]
        %v306 = vld [vmem:[%s297 + $0x20] sm:$0xf]
        %v307 = vld [vmem:[%s297 + $0x24] sm:$0xf]
        %v308 = vld [vmem:[%s297 + $0x28] sm:$0xf]
        %v309 = vld [vmem:[%s297 + $0x2c] sm:$0xf]
        %v310 = vld [vmem:[%s297 + $0x30] sm:$0xf]
        %v311 = vld [vmem:[%s297 + $0x34] sm:$0xf]
        %v312 = vld [vmem:[%s297 + $0x38] sm:$0xf]
        %v313 = vld [vmem:[%s297 + $0x3c] sm:$0xf]
        %v318 = vunpack.c.l.b16 %v291
        %v319 = vunpack.c.l.b16 %v292
        %v320 = vunpack.c.l.b16 %v293
        %v321 = vunpack.c.l.b16 %v294
        %v322 = vpack.c.b16 %v319, %v318
        %v323 = vpack.c.b16 %v321, %v320
        %v342 = vunpack.c.l.b16 %v298
        %v343 = vunpack.c.l.b16 %v299
        %v344 = vunpack.c.l.b16 %v300
        %v345 = vunpack.c.l.b16 %v301
        %v346 = vunpack.c.l.b16 %v302
        %v347 = vunpack.c.l.b16 %v303
        %v348 = vunpack.c.l.b16 %v304
        %v349 = vunpack.c.l.b16 %v305
        %v350 = vunpack.c.l.b16 %v306
        %v351 = vunpack.c.l.b16 %v307
        %v352 = vunpack.c.l.b16 %v308
        %v353 = vunpack.c.l.b16 %v309
        %v354 = vunpack.c.l.b16 %v310
        %v355 = vunpack.c.l.b16 %v311
        %v356 = vunpack.c.l.b16 %v312
        %v357 = vunpack.c.l.b16 %v313
        %v358 = vpack.c.b16 %v343, %v342
        %v359 = vpack.c.b16 %v345, %v344
        %v360 = vpack.c.b16 %v347, %v346
        %v361 = vpack.c.b16 %v349, %v348
        %v362 = vpack.c.b16 %v351, %v350
        %v363 = vpack.c.b16 %v353, %v352
        %v364 = vpack.c.b16 %v355, %v354
        %v365 = vpack.c.b16 %v357, %v356
        %374 = vmatprep.subr.bf16.mxu0 0
        %375 = vmatpush1.bf16.msra.mxu0 %v365
        %376 = vmatprep.subr.bf16.mxu0 0
        %377 = vmatpush1.bf16.msra.mxu0 %v364
        %378 = vmatprep.subr.bf16.mxu0 0
        %379 = vmatpush1.bf16.msra.mxu0 %v363
        %380 = vmatprep.subr.bf16.mxu0 0
        %381 = vmatpush1.bf16.msra.mxu0 %v362
        %382 = vmatprep.subr.bf16.mxu0 0
        %383 = vmatpush1.bf16.msra.mxu0 %v361
        %384 = vmatprep.subr.bf16.mxu0 0
        %385 = vmatpush1.bf16.msra.mxu0 %v360
        %386 = vmatprep.subr.bf16.mxu0 0
        %387 = vmatpush1.bf16.msra.mxu0 %v359
        %388 = vmatprep.subr.bf16.mxu0 0
        %389 = vmatpush1.bf16.msra.mxu0 %v358
        %390 = vmatprep.subr.bf16.mxu0 0
        %391 = vmatpush2.bf16.msra.mxu0 0
        %392 = vmatprep.subr.bf16.mxu0 0
        %393 = vmatpush2.bf16.msra.mxu0 0
        %394 = vmatprep.subr.bf16.mxu0 0
        %395 = vmatpush2.bf16.msra.mxu0 0
        %396 = vmatprep.subr.bf16.mxu0 0
        %397 = vmatpush2.bf16.msra.mxu0 0
        %398 = vmatprep.subr.bf16.mxu0 0
        %399 = vmatpush2.bf16.msra.mxu0 0
        %400 = vmatprep.subr.bf16.mxu0 0
        %401 = vmatpush2.bf16.msra.mxu0 0
        %402 = vmatprep.subr.bf16.mxu0 0
        %403 = vmatpush2.bf16.msra.mxu0 0
        %404 = vmatprep.subr.bf16.mxu0 0
        %405 = vmatpush2.bf16.msra.mxu0 0
        %406 = vmatprep.mubr.bf16.mxu0 0
        %407 = vmatmul.mubr.bf16.gmra.mxu0 %v322
        %v408 = vpop.f32.mrf.mxu0
        %v409 = vadd.f32 0.0, %v408
        %v410 = vpop.f32.mrf.mxu0
        %v411 = vpop.f32.mrf.mxu0
        %v412 = vadd.f32 0.0, %v411
        %v413 = vpop.f32.mrf.mxu0
        %414 = vmatprep.mubr.bf16.mxu0 0
        %415 = vmatmul.mubr.bf16.gmra.mxu0 %v323
        %v416 = vpop.f32.mrf.mxu0
        %v417 = vadd.f32 0.0, %v416
        %v418 = vpop.f32.mrf.mxu0
        %v419 = vpop.f32.mrf.mxu0
        %v420 = vadd.f32 0.0, %v419
        %v421 = vpop.f32.mrf.mxu0
        %422 = vdwg.mxu0
        %v423 = vpack.c.bf16 %v412, %v409
        %v424 = vpack.c.bf16 %v420, %v417
        %v427 = vunpack.c.l.b16 %v423
        %v428 = vunpack.c.h.b16 %v423
        %v429 = vunpack.c.l.b16 %v424
        %v430 = vunpack.c.h.b16 %v424
        %v431 = vpack.c.b16 %v427, %v427
        %v432 = vpack.c.b16 %v428, %v428
        %v433 = vpack.c.b16 %v429, %v429
        %v434 = vpack.c.b16 %v430, %v430
        %439 = vst [vmem:[#allocation3] sm:$0xf] %v431
        %440 = vst [vmem:[#allocation3 + $0x4] sm:$0xf] %v432
        %441 = vst [vmem:[#allocation3 + $0x8] sm:$0xf] %v433
        %442 = vst [vmem:[#allocation3 + $0xc] sm:$0xf] %v434
      $region52: #{jknet_concat_forward.1} parent=43 // pred_fallthru
        _
      %p443 = scmp.eq.s32.totalorder %s21, 3
      %p444 = pnand %p269, %p443
      %p445 = pneg %p444
      // Predicated region
      $region53: #{jknet_concat_forward.1} parent=43 // pred_check
        _
      $region54: #{jknet_concat_forward.1} parent=43 // pred_check_branch
        %447 = sbr.rel (%p444) target = $region56
      $region55: #{jknet_concat_forward.1} parent=43 // pred_region
        %v448 = vld [vmem:[#allocation4] sm:$0xff]
        %v449 = vld [vmem:[#allocation4 + $0x8] sm:$0xff]
        %v450 = vld [vmem:[#allocation4 + $0x10] sm:$0xff]
        %v451 = vld [vmem:[#allocation4 + $0x18] sm:$0xff]
        %v452 = vpack.c.bf16 %v449, %v448
        %v453 = vpack.c.bf16 %v451, %v450
        %v456 = vunpack.c.l.b16 %v452
        %v457 = vunpack.c.h.b16 %v452
        %v458 = vunpack.c.l.b16 %v453
        %v459 = vunpack.c.h.b16 %v453
        %v460 = vpack.c.b16 %v456, %v456
        %v461 = vpack.c.b16 %v457, %v457
        %v462 = vpack.c.b16 %v458, %v458
        %v463 = vpack.c.b16 %v459, %v459
        %468 = vst [vmem:[#allocation3] sm:$0xf] %v460
        %469 = vst [vmem:[#allocation3 + $0x4] sm:$0xf] %v461
        %470 = vst [vmem:[#allocation3 + $0x8] sm:$0xf] %v462
        %471 = vst [vmem:[#allocation3 + $0xc] sm:$0xf] %v463
      $region56: #{jknet_concat_forward.1} parent=43 // pred_fallthru
        _
      %v472 = vld [vmem:[%s259] sm:$0xf]
      %v473 = vld [vmem:[%s259 + $0x4] sm:$0xf]
      %v474 = vld [vmem:[%s259 + $0x8] sm:$0xf]
      %v475 = vld [vmem:[%s259 + $0xc] sm:$0xf]
      %v476 = vld [vmem:[#allocation3] sm:$0xf]
      %v477 = vld [vmem:[#allocation3 + $0x4] sm:$0xf]
      %v478 = vld [vmem:[#allocation3 + $0x8] sm:$0xf]
      %v479 = vld [vmem:[#allocation3 + $0xc] sm:$0xf]
      %v484 = vunpack.c.l.b16 %v472
      %v485 = vunpack.c.l.b16 %v473
      %v486 = vunpack.c.l.b16 %v474
      %v487 = vunpack.c.l.b16 %v475
      %v488 = vpack.c.b16 %v485, %v484
      %v489 = vpack.c.b16 %v487, %v486
      %v494 = vunpack.c.l.b16 %v476
      %v495 = vunpack.c.l.b16 %v477
      %v496 = vunpack.c.l.b16 %v478
      %v497 = vunpack.c.l.b16 %v479
      %v498 = vpack.c.b16 %v495, %v494
      %v499 = vpack.c.b16 %v497, %v496
      %vm502 = vcmask 261120
      %v504 = vsel %vm502, %v488, 0
      %v507 = vsel %vm502, %v489, 0
      %509 = vmatprep.subr.bf16.mxu0 0
      %510 = vmatpush1.bf16.msra.mxu0 0
      %511 = vmatprep.subr.bf16.mxu0 0
      %512 = vmatpush1.bf16.msra.mxu0 0
      %513 = vmatprep.subr.bf16.mxu0 0
      %514 = vmatpush1.bf16.msra.mxu0 0
      %515 = vmatprep.subr.bf16.mxu0 0
      %516 = vmatpush1.bf16.msra.mxu0 0
      %517 = vmatprep.subr.bf16.mxu0 0
      %518 = vmatpush1.bf16.msra.mxu0 0
      %519 = vmatprep.subr.bf16.mxu0 0
      %520 = vmatpush1.bf16.msra.mxu0 0
      %521 = vmatprep.subr.bf16.mxu0 0
      %522 = vmatpush1.bf16.msra.mxu0 %v499
      %523 = vmatprep.subr.bf16.mxu0 0
      %524 = vmatpush1.bf16.msra.mxu0 %v498
      %525 = vmatprep.subr.bf16.mxu0 0
      %526 = vmatpush2.bf16.msra.mxu0 0
      %527 = vmatprep.subr.bf16.mxu0 0
      %528 = vmatpush2.bf16.msra.mxu0 0
      %529 = vmatprep.subr.bf16.mxu0 0
      %530 = vmatpush2.bf16.msra.mxu0 0
      %531 = vmatprep.subr.bf16.mxu0 0
      %532 = vmatpush2.bf16.msra.mxu0 0
      %533 = vmatprep.subr.bf16.mxu0 0
      %534 = vmatpush2.bf16.msra.mxu0 0
      %535 = vmatprep.subr.bf16.mxu0 0
      %536 = vmatpush2.bf16.msra.mxu0 0
      %537 = vmatprep.subr.bf16.mxu0 0
      %538 = vmatpush2.bf16.msra.mxu0 0
      %539 = vmatprep.subr.bf16.mxu0 0
      %540 = vmatpush2.bf16.msra.mxu0 0
      %541 = vmatprep.mubr.bf16.mxu0 0
      %542 = vmatmul.mubr.bf16.gmra.mxu0 %v504
      %v543 = vpop.f32.mrf.mxu0
      %v544 = vadd.f32 0.0, %v543
      %v545 = vpop.f32.mrf.mxu0
      %v546 = vpop.f32.mrf.mxu0
      %v547 = vadd.f32 0.0, %v546
      %v548 = vpop.f32.mrf.mxu0
      %549 = vmatprep.mubr.bf16.mxu0 0
      %550 = vmatmul.mubr.bf16.gmra.mxu0 %v507
      %v551 = vpop.f32.mrf.mxu0
      %v552 = vadd.f32 0.0, %v551
      %v553 = vpop.f32.mrf.mxu0
      %v554 = vpop.f32.mrf.mxu0
      %v555 = vadd.f32 0.0, %v554
      %v556 = vpop.f32.mrf.mxu0
      %557 = vdwg.mxu0
      %s558 = smul.u32 %s22, 32
      // Predicated region
      $region57: #{jknet_concat_forward.1} parent=43 // pred_check
        %p559 = pneg %p286
      $region58: #{jknet_concat_forward.1} parent=43 // pred_check_branch
        %561 = sbr.rel (%p559) target = $region60
      $region59: #{jknet_concat_forward.1} parent=43 // pred_region
        %s562 = scalar_lea.vmem %s3, %s21
        %v563 = vld [vmem:[%s562] sm:$0x1]
        %v565 = vlaneseq
        %v566 = vshrl.u32 %v565, 7
        %v567 = vsub.s32 0, %v566
        %v568 = vrot.slane %v563, %v567
        %v570 = vadd.f32 %v544, %v568
        %v571 = vadd.f32 %v547, %v568
        %v572 = vadd.f32 %v552, %v568
        %v573 = vadd.f32 %v555, %v568
        %v574 = vmax.f32 %v570, 0.0
        %v575 = vmax.f32 %v571, 0.0
        %v576 = vmax.f32 %v572, 0.0
        %v577 = vmax.f32 %v573, 0.0
        %v578 = vpack.c.bf16 %v575, %v574
        %v579 = vpack.c.bf16 %v577, %v576
        %v582 = vunpack.c.l.b16 %v578
        %v583 = vunpack.c.h.b16 %v578
        %v584 = vunpack.c.l.b16 %v579
        %v585 = vunpack.c.h.b16 %v579
        %v586 = vpack.c.b16 %v582, %v582
        %v587 = vpack.c.b16 %v583, %v583
        %v588 = vpack.c.b16 %v584, %v584
        %v589 = vpack.c.b16 %v585, %v585
        %s594 = sshra.s32 %s558, 3
        %s595 = sand.u32 %s558, 7
        %s596 = smul.addr %s594, 4
        %s597 = scalar_lea.vmem [#allocation2], %s596
        %598 = vst [vmem:[%s597] sm:$0xf] %v586
        %599 = vst [vmem:[%s597 + $0x4] sm:$0xf] %v587
        %600 = vst [vmem:[%s597 + $0x8] sm:$0xf] %v588
        %601 = vst [vmem:[%s597 + $0xc] sm:$0xf] %v589
        %s602 = smul.u32 %s21, 128
        %s603 = scalar_lea.vmem [#allocation4], %s558
        %v604 = vld [vmem:[%s603] sm:$0xff]
        %v605 = vld [vmem:[%s603 + $0x8] sm:$0xff]
        %v606 = vld [vmem:[%s603 + $0x10] sm:$0xff]
        %v607 = vld [vmem:[%s603 + $0x18] sm:$0xff]
        %s608 = sshra.s32 %s602, 3
        %s609 = sand.u32 %s602, 7
        %s610 = smul.addr %s608, 4
        %s611 = scalar_lea.vmem %s4, %s610
        %v612 = vld [vmem:[%s611] sm:$0xf]
        %v613 = vld [vmem:[%s611 + $0x4] sm:$0xf]
        %v614 = vld [vmem:[%s611 + $0x8] sm:$0xf]
        %v615 = vld [vmem:[%s611 + $0xc] sm:$0xf]
        %v616 = vld [vmem:[%s611 + $0x10] sm:$0xf]
        %v617 = vld [vmem:[%s611 + $0x14] sm:$0xf]
        %v618 = vld [vmem:[%s611 + $0x18] sm:$0xf]
        %v619 = vld [vmem:[%s611 + $0x1c] sm:$0xf]
        %v620 = vld [vmem:[%s611 + $0x20] sm:$0xf]
        %v621 = vld [vmem:[%s611 + $0x24] sm:$0xf]
        %v622 = vld [vmem:[%s611 + $0x28] sm:$0xf]
        %v623 = vld [vmem:[%s611 + $0x2c] sm:$0xf]
        %v624 = vld [vmem:[%s611 + $0x30] sm:$0xf]
        %v625 = vld [vmem:[%s611 + $0x34] sm:$0xf]
        %v626 = vld [vmem:[%s611 + $0x38] sm:$0xf]
        %v627 = vld [vmem:[%s611 + $0x3c] sm:$0xf]
        %v644 = vunpack.c.l.b16 %v612
        %v645 = vunpack.c.l.b16 %v613
        %v646 = vunpack.c.l.b16 %v614
        %v647 = vunpack.c.l.b16 %v615
        %v648 = vunpack.c.l.b16 %v616
        %v649 = vunpack.c.l.b16 %v617
        %v650 = vunpack.c.l.b16 %v618
        %v651 = vunpack.c.l.b16 %v619
        %v652 = vunpack.c.l.b16 %v620
        %v653 = vunpack.c.l.b16 %v621
        %v654 = vunpack.c.l.b16 %v622
        %v655 = vunpack.c.l.b16 %v623
        %v656 = vunpack.c.l.b16 %v624
        %v657 = vunpack.c.l.b16 %v625
        %v658 = vunpack.c.l.b16 %v626
        %v659 = vunpack.c.l.b16 %v627
        %v660 = vpack.c.b16 %v645, %v644
        %v661 = vpack.c.b16 %v647, %v646
        %v662 = vpack.c.b16 %v649, %v648
        %v663 = vpack.c.b16 %v651, %v650
        %v664 = vpack.c.b16 %v653, %v652
        %v665 = vpack.c.b16 %v655, %v654
        %v666 = vpack.c.b16 %v657, %v656
        %v667 = vpack.c.b16 %v659, %v658
        %676 = vmatprep.subr.bf16.mxu0 0
        %677 = vmatpush1.bf16.msra.mxu0 %v667
        %678 = vmatprep.subr.bf16.mxu0 0
        %679 = vmatpush1.bf16.msra.mxu0 %v666
        %680 = vmatprep.subr.bf16.mxu0 0
        %681 = vmatpush1.bf16.msra.mxu0 %v665
        %682 = vmatprep.subr.bf16.mxu0 0
        %683 = vmatpush1.bf16.msra.mxu0 %v664
        %684 = vmatprep.subr.bf16.mxu0 0
        %685 = vmatpush1.bf16.msra.mxu0 %v663
        %686 = vmatprep.subr.bf16.mxu0 0
        %687 = vmatpush1.bf16.msra.mxu0 %v662
        %688 = vmatprep.subr.bf16.mxu0 0
        %689 = vmatpush1.bf16.msra.mxu0 %v661
        %690 = vmatprep.subr.bf16.mxu0 0
        %691 = vmatpush1.bf16.msra.mxu0 %v660
        %692 = vmatprep.subr.bf16.mxu0 0
        %693 = vmatpush2.bf16.msra.mxu0 0
        %694 = vmatprep.subr.bf16.mxu0 0
        %695 = vmatpush2.bf16.msra.mxu0 0
        %696 = vmatprep.subr.bf16.mxu0 0
        %697 = vmatpush2.bf16.msra.mxu0 0
        %698 = vmatprep.subr.bf16.mxu0 0
        %699 = vmatpush2.bf16.msra.mxu0 0
        %700 = vmatprep.subr.bf16.mxu0 0
        %701 = vmatpush2.bf16.msra.mxu0 0
        %702 = vmatprep.subr.bf16.mxu0 0
        %703 = vmatpush2.bf16.msra.mxu0 0
        %704 = vmatprep.subr.bf16.mxu0 0
        %705 = vmatpush2.bf16.msra.mxu0 0
        %706 = vmatprep.subr.bf16.mxu0 0
        %707 = vmatpush2.bf16.msra.mxu0 0
        %708 = vmatprep.mubr.bf16.mxu0 0
        %709 = vmatmul.mubr.bf16.gmra.mxu0 %v578
        %v710 = vpop.f32.mrf.mxu0
        %v711 = vadd.f32 0.0, %v710
        %v712 = vpop.f32.mrf.mxu0
        %v713 = vpop.f32.mrf.mxu0
        %v714 = vadd.f32 0.0, %v713
        %v715 = vpop.f32.mrf.mxu0
        %716 = vmatprep.mubr.bf16.mxu0 0
        %717 = vmatmul.mubr.bf16.gmra.mxu0 %v579
        %v718 = vpop.f32.mrf.mxu0
        %v719 = vadd.f32 0.0, %v718
        %v720 = vpop.f32.mrf.mxu0
        %v721 = vpop.f32.mrf.mxu0
        %v722 = vadd.f32 0.0, %v721
        %v723 = vpop.f32.mrf.mxu0
        %724 = vdwg.mxu0
        %v725 = vadd.f32 %v604, %v711
        %v726 = vadd.f32 %v605, %v714
        %v727 = vadd.f32 %v606, %v719
        %v728 = vadd.f32 %v607, %v722
        %729 = vst [vmem:[%s603] sm:$0xff] %v725
        %730 = vst [vmem:[%s603 + $0x8] sm:$0xff] %v726
        %731 = vst [vmem:[%s603 + $0x10] sm:$0xff] %v727
        %732 = vst [vmem:[%s603 + $0x18] sm:$0xff] %v728
        %v733 = vunpack.c.l.bf16 %v578
        %v734 = vunpack.c.h.bf16 %v578
        %v735 = vunpack.c.l.bf16 %v579
        %v736 = vunpack.c.h.bf16 %v579
        %737 = vst [vmem:[%s265] sm:$0xff] %v733
        %738 = vst [vmem:[%s265 + $0x8] sm:$0xff] %v734
        %739 = vst [vmem:[%s265 + $0x10] sm:$0xff] %v735
        %740 = vst [vmem:[%s265 + $0x18] sm:$0xff] %v736
      $region60: #{jknet_concat_forward.1} parent=43 // pred_fallthru
        _
      // Predicated region
      $region61: #{jknet_concat_forward.1} parent=43 // pred_check
        %p741 = pneg %p443
      $region62: #{jknet_concat_forward.1} parent=43 // pred_check_branch
        %743 = sbr.rel (%p741) target = $region64
      $region63: #{jknet_concat_forward.1} parent=43 // pred_region
        %v744 = vld [vmem:[%s5] sm:$0x1]
        %v746 = vlaneseq
        %v747 = vshrl.u32 %v746, 7
        %v748 = vsub.s32 0, %v747
        %v749 = vrot.slane %v744, %v748
        %v751 = vadd.f32 %v544, %v749
        %v752 = vadd.f32 %v547, %v749
        %v753 = vadd.f32 %v552, %v749
        %v754 = vadd.f32 %v555, %v749
        %v755 = vlaneseq
        %v756 = vand.u32 %v755, 127
        %vm757 = vcmp.lt.s32.totalorder %v756, 8
        %v758 = vsel %vm757, %v751, -1e+30
        %v759 = vsel %vm757, %v752, -1e+30
        %v760 = vsel %vm757, %v753, -1e+30
        %v761 = vsel %vm757, %v754, -1e+30
        %762 = vmax.xlane.f32.xlu0 %v758
        %v763 = vpop.xlane.xlu0 %762
        %764 = vmax.xlane.f32.xlu0 %v759
        %v765 = vpop.xlane.xlu0 %764
        %766 = vmax.xlane.f32.xlu0 %v760
        %v767 = vpop.xlane.xlu0 %766
        %768 = vmax.xlane.f32.xlu0 %v761
        %v769 = vpop.xlane.xlu0 %768
        %v770 = vsub.f32 %v758, %v763
        %v771 = vsub.f32 %v759, %v765
        %v772 = vsub.f32 %v760, %v767
        %v773 = vsub.f32 %v761, %v769
        %v774 = vmul.f32 %v770, 1.442695
        %v775 = vpow.pop %v774
        %v776 = vmul.f32 %v771, 1.442695
        %v777 = vpow.pop %v776
        %v778 = vmul.f32 %v772, 1.442695
        %v779 = vpow.pop %v778
        %v780 = vmul.f32 %v773, 1.442695
        %v781 = vpow.pop %v780
        %782 = vadd.xlane.f32.xlu0 %v775
        %v783 = vpop.xlane.xlu0 %782
        %784 = vadd.xlane.f32.xlu0 %v777
        %v785 = vpop.xlane.xlu0 %784
        %786 = vadd.xlane.f32.xlu0 %v779
        %v787 = vpop.xlane.xlu0 %786
        %788 = vadd.xlane.f32.xlu0 %v781
        %v789 = vpop.xlane.xlu0 %788
        %v790 = vlog2.pop %v783
        %v791 = vmul.f32 %v790, 0.6931472
        %v792 = vlog2.pop %v785
        %v793 = vmul.f32 %v792, 0.6931472
        %v794 = vlog2.pop %v787
        %v795 = vmul.f32 %v794, 0.6931472
        %v796 = vlog2.pop %v789
        %v797 = vmul.f32 %v796, 0.6931472
        %v798 = vsub.f32 %v770, %v791
        %v799 = vsub.f32 %v771, %v793
        %v800 = vsub.f32 %v772, %v795
        %v801 = vsub.f32 %v773, %v797
        %802 = vst [vmem:[%s265] sm:$0xff] %v798
        %803 = vst [vmem:[%s265 + $0x8] sm:$0xff] %v799
        %804 = vst [vmem:[%s265 + $0x10] sm:$0xff] %v800
        %805 = vst [vmem:[%s265 + $0x18] sm:$0xff] %v801
      $region64: #{jknet_concat_forward.1} parent=43 // pred_fallthru
        _
      %s806 = smul.u32 4, %s22
      %p807 = scmp.lt.s32.totalorder %s806, 3
      %s808 = scalar_select %p807, %s806, 3
      %s809 = smul.addr %s808, 8
      %s810 = scalar_lea.vmem %s6, %s809
      // Predicated region
      $region65: #{jknet_concat_forward.1} parent=43 // pred_check
        %p811 = pneg %p178
      $region66: #{jknet_concat_forward.1} parent=43 // pred_check_branch
        %813 = sbr.rel (%p811) target = $region68
      $region67: #{jknet_concat_forward.1} parent=43 // pred_region
        %s814 = smul.u32 4, %s22
      $region68: #{jknet_concat_forward.1} parent=43 // pred_fallthru
        _
      // Predicated region
      $region69: #{jknet_concat_forward.1} parent=43 // pred_check
        %p815 = pneg %p178
      $region70: #{jknet_concat_forward.1} parent=43 // pred_check_branch
        %817 = sbr.rel (%p815) target = $region72
      $region71: #{jknet_concat_forward.1} parent=43 // pred_region
        %s818 = smul.u32 4, %s22
        %p819 = scmp.lt.s32.totalorder %s818, 3
        %s820 = scalar_select %p819, %s818, 3
        %s821 = smul.addr %s820, 8
        %s822 = scalar_lea.vmem %s6, %s821
      $region72: #{jknet_concat_forward.1} parent=43 // pred_fallthru
        _
    $region44: #{jknet_concat_forward.1} parent=5 // pred_fallthru
      _
    %p823 = scmp.le.s32.totalorder 2, %s12
    // Predicated region
    $region73: #{jknet_concat_forward.1} parent=5 // pred_check
      %p824 = pneg %p823
    $region74: #{jknet_concat_forward.1} parent=5 // pred_check_branch
      %826 = sbr.rel (%p824) target = $region76
    $region75: #{jknet_concat_forward.1} parent=5 // pred_region
      %s827 = ssub.s32 %s12, 2
    $region76: #{jknet_concat_forward.1} parent=5 // pred_fallthru
      _
  $region6: #{jknet_concat_forward.1} parent=0 // loop_footer
    %s16 = sadd.s32 1, %s12
  $region7: #{jknet_concat_forward.1} parent=0 // loop_footer_branch
    %11 = sbr.rel target = $region3
  $region8: #{jknet_concat_forward.1} parent=0 // loop_exit
    _

</llo_original>
